<compile_context>
chip_gen: v5e
topology: v5e:2x2
jax: 0.10.0
libtpu: 0.0.40
codegen_flags: <defaults>
</compile_context>

<pallas_src>
import math

import jax
import jax.numpy as jnp
from jax.experimental import pallas as pl
from jax.experimental.pallas import tpu as pltpu

_LANE = 128
# Total budget for double-buffered streamed tiles (in + out [+ residual]).
_VMEM_TILE_BUDGET_BYTES = 24 * 1024 * 1024
_VMEM_LIMIT_BYTES = 32 * 1024 * 1024


def _round_up(v, m):
    return -(-v // m) * m


def _drop_path_kernel(scale_ref, x_ref, o_ref):
    # scale_ref: (B,) f32 in SMEM (scalar prefetch), per-sample 0.0 or 1/keep_prob
    # x_ref / o_ref: (TR, 128) VMEM tile of the current (batch, row-tile)
    b = pl.program_id(0)
    scale = scale_ref[b]  # f32 scalar
    o_ref[...] = (x_ref[...] * scale).astype(o_ref.dtype)


def _drop_path_residual_kernel(scale_ref, x_ref, res_ref, o_ref):
    # Fused residual: out = residual + scale * x (one streamed pass instead of two).
    b = pl.program_id(0)
    scale = scale_ref[b]
    o_ref[...] = (res_ref[...].astype(jnp.float32)
                  + x_ref[...].astype(jnp.float32) * scale).astype(o_ref.dtype)


def _choose_tile_rows(n_rows, dtype_bytes, n_streams, batch):
    """Row-tile size: multiple of 32 sublanes (or the full row dim) sized so all
    double-buffered streamed tiles fit the VMEM budget, while keeping at least a
    few grid steps so v7x's two TensorCores can both be used."""
    tile_target_bytes = _VMEM_TILE_BUDGET_BYTES // (2 * n_streams)
    target_rows = max(32, (tile_target_bytes // (_LANE * dtype_bytes)) // 32 * 32)
    if n_rows <= target_rows:
        tr = n_rows          # block dim equals full array dim -> always legal
    else:
        tr = target_rows     # multiple of 32; ragged final tile is masked by Pallas
    # Megacore (v7x): guarantee ~4 total grid steps when the data allows it.
    if batch * pl.cdiv(n_rows, tr) < 4 and n_rows > 8:
        want_tiles = pl.cdiv(4, batch)
        tr_small = min(n_rows, _round_up(pl.cdiv(n_rows, want_tiles), 8))
        if 0 < tr_small < tr:
            tr = tr_small
    return tr


def drop_path_pallas(x, scale, residual=None):
    """out[b] = (residual[b] +) scale[b] * x[b].

    x, residual: (B, ...) arbitrary per-sample shape; scale: (B,) float32.
    """
    B = x.shape[0]
    orig_shape = x.shape
    M = math.prod(orig_shape[1:]) if x.ndim > 1 else 1

    n_rows = pl.cdiv(M, _LANE)
    padded_m = n_rows * _LANE

    def to_3d(a):
        a = a.reshape(B, M)
        if padded_m != M:
            # Only fires when the per-sample size is not a multiple of 128 lanes.
            a = jnp.pad(a, ((0, 0), (0, padded_m - M)))
        return a.reshape(B, n_rows, _LANE)

    x3 = to_3d(x)
    inputs = [scale, x3]
    n_streams = 2  # x stream + out stream
    if residual is not None:
        inputs.append(to_3d(residual.astype(x.dtype)))
        n_streams = 3

    tr = _choose_tile_rows(n_rows, x.dtype.itemsize, n_streams, B)
    grid = (B, pl.cdiv(n_rows, tr))

    # Squeezed batch dim -> kernel refs are clean 2-D (tr, 128) tiles.
    blk = pl.BlockSpec((pl.Squeezed(), tr, _LANE),
                       lambda b, r, scale_ref: (b, r, 0))

    kernel = _drop_path_kernel if residual is None else _drop_path_residual_kernel
    n_ops_per_elem = 1 if residual is None else 2
    alias_idx = len(inputs) - 1  # last streamed input (x or residual) -> output 0

    out = pl.pallas_call(
        kernel,
        out_shape=jax.ShapeDtypeStruct((B, n_rows, _LANE), x.dtype),
        grid_spec=pltpu.PrefetchScalarGridSpec(
            num_scalar_prefetch=1,
            grid=grid,
            in_specs=[blk] * (len(inputs) - 1),
            out_specs=blk,
        ),
        compiler_params=pltpu.CompilerParams(
            dimension_semantics=("parallel", "parallel"),
            vmem_limit_bytes=_VMEM_LIMIT_BYTES),
        input_output_aliases={alias_idx: 0},
        cost_estimate=pl.CostEstimate(
            flops=B * padded_m * n_ops_per_elem,
            transcendentals=0,
            bytes_accessed=n_streams * B * padded_m * x.dtype.itemsize),
    )(*inputs)

    out = out.reshape(B, padded_m)
    if padded_m != M:
        out = out[:, :M]
    return out.reshape(orig_shape)


class DropPath:
    """Drop paths (Stochastic Depth) per sample — Pallas/TPU version."""

    def __init__(self, drop_prob=None):
        self.drop_prob = drop_prob
        self.training = True  # mirror nn.Module default-after-.train()

    def __call__(self, x, key):
        if self.drop_prob in (None, 0.0) or not self.training:
            return x
        keep_prob = 1.0 - self.drop_prob
        B = x.shape[0]
        # Same recipe as the PyTorch code: floor(keep_prob + U[0,1))
        #  -> 1.0 with prob keep_prob, else 0.0.  Precompute the full per-sample
        # scale (0 or 1/keep_prob) in f32 so the kernel body is a single vmul.
        u = jax.random.uniform(key, (B,), dtype=jnp.float32)
        mask = jnp.floor(keep_prob + u)
        scale = mask * jnp.float32(1.0 / keep_prob)
        return drop_path_pallas(x, scale)


if __name__ == "__main__":
    key = jax.random.PRNGKey(0)
    kx, km, kr = jax.random.split(key, 3)

    B, N, D = 2, 8, 32
    x = jax.random.normal(kx, (B, N, D), dtype=jnp.float32)

    drop_prob = 0.25
    mod = DropPath(drop_prob=drop_prob)
    y = mod(x, km)
    jax.block_until_ready(y)

    # reference (pure JAX) check of the same semantics
    keep_prob = 1.0 - drop_prob
    u = jax.random.uniform(km, (B,), dtype=jnp.float32)
    mask = jnp.floor(keep_prob + u)
    ref = x / keep_prob * mask[:, None, None]
    assert y.shape == x.shape and y.dtype == x.dtype
    assert jnp.allclose(y, ref, atol=1e-6), "DropPath kernel mismatch"

    # fused residual path: out = res + drop_path(x)
    scale = mask * jnp.float32(1.0 / keep_prob)
    res = jax.random.normal(kr, (B, N, D), dtype=jnp.float32)
    y_fused = drop_path_pallas(x, scale, residual=res)
    jax.block_until_ready(y_fused)
    assert jnp.allclose(y_fused, res + ref, atol=1e-5), "fused residual mismatch"

    # ragged per-sample size (not a multiple of 128 lanes) exercises the tail path
    x_r = jax.random.normal(kx, (B, 5, 48), dtype=jnp.float32)
    y_r = drop_path_pallas(x_r, scale)
    jax.block_until_ready(y_r)
    ref_r = x_r * scale[:, None, None]
    assert jnp.allclose(y_r, ref_r, atol=1e-6), "ragged-tail mismatch"

    # eval / drop_prob=0 path returns x unchanged
    mod.training = False
    assert jnp.array_equal(mod(x, km), x)
    mod.training = True
    mod0 = DropPath(drop_prob=0.0)
    assert jnp.array_equal(mod0(x, km), x)

    print("KERNEL_OK")
</pallas_src>

<mosaic_0001>
module attributes {stable_mosaic.version = 11 : i64} {
  func.func @_drop_path_kernel(%arg0: i32, %arg1: i32, %arg2: memref<2xf32, #tpu.memory_space<smem>>, %arg3: memref<1x2x128xf32, #tpu.memory_space<vmem>>, %arg4: memref<1x2x128xf32, #tpu.memory_space<vmem>>) attributes {dimension_semantics = [#tpu.dimension_semantics<parallel>, #tpu.dimension_semantics<parallel>], iteration_bounds = array<i64: 2, 1>, scalar_prefetch = 1 : i64, scratch_operands = 0 : i64, tpu.core_type = #tpu.core_type<tc>, window_params = [{transform_indices = @transform_0, window_bounds = array<i64: 1, 2, 128>}, {transform_indices = @transform_1, window_bounds = array<i64: 1, 2, 128>}]} {
    %0 = arith.index_cast %arg0 : i32 to index
    %1 = memref.load %arg2[%0] : memref<2xf32, #tpu.memory_space<smem>>
    %c0 = arith.constant 0 : index
    %c0_0 = arith.constant 0 : index
    %c0_1 = arith.constant 0 : index
    %2 = vector.load %arg3[%c0, %c0_0, %c0_1] : memref<1x2x128xf32, #tpu.memory_space<vmem>>, vector<1x2x128xf32>
    %3 = vector.shape_cast %2 : vector<1x2x128xf32> to vector<2x128xf32>
    %4 = vector.broadcast %1 : f32 to vector<2x128xf32>
    %5 = arith.mulf %3, %4 : vector<2x128xf32>
    %c0_2 = arith.constant 0 : index
    %c0_3 = arith.constant 0 : index
    %c0_4 = arith.constant 0 : index
    %6 = vector.load %arg4[%c0_2, %c0_3, %c0_4] : memref<1x2x128xf32, #tpu.memory_space<vmem>>, vector<1x2x128xf32>
    %7 = vector.shape_cast %6 : vector<1x2x128xf32> to vector<2x128xf32>
    %8 = vector.shape_cast %5 : vector<2x128xf32> to vector<1x2x128xf32>
    tpu.vector_store %arg4[%c0_2, %c0_3, %c0_4], %8 {strides = array<i32>} : memref<1x2x128xf32, #tpu.memory_space<vmem>>, vector<1x2x128xf32>,
    return
  }
  func.func @transform_0(%arg0: i32, %arg1: i32, %arg2: memref<2xf32, #tpu.memory_space<smem>>) -> (i32, i32, i32) {
    %c0_i32 = arith.constant 0 : i32
    %c0_i32_0 = arith.constant 0 : i32
    return %arg0, %arg1, %c0_i32 : i32, i32, i32
  }
  func.func @transform_1(%arg0: i32, %arg1: i32, %arg2: memref<2xf32, #tpu.memory_space<smem>>) -> (i32, i32, i32) {
    %c0_i32 = arith.constant 0 : i32
    %c0_i32_0 = arith.constant 0 : i32
    return %arg0, %arg1, %c0_i32 : i32, i32, i32
  }
}

</mosaic_0001>

<llo_original>
// kernel: tpu_custom_call.1
$region0: #{tpu_custom_call.1}
  #allocation0 [shape = 'u32[]', space=smem, size = 0x4, offset = 0x4, fixed_abs, tag = 'smem constant byte address 0x4 - core index']
  #allocation1 [shape = 'u32[72,128]{1,0:T(1,128)}', space=vmem, size = 0x9000, scoped, tag = 'internal scratch']
  #allocation2 [shape = 's32[1]{0}', space=sflag, size = 0x4, scoped, tag = 'scoped memory for tpu_custom_call.1']
  #allocation3 [shape = 'u8[512]{0}', space=smem, size = 0x200, scoped, tag = 'prefetched SMEM operand 0']
  %s0 = inlined_call_operand.vmem [shape: f32[2], index: 0, kind: input, shape index: {}]
  %s1 = inlined_call_operand.hbm [shape: f32[2,2,128], index: 1, kind: input, shape index: {}, may-alias: {1,2}]
  %s2 = inlined_call_operand.hbm [shape: f32[2,2,128], index: 2, kind: output, shape index: {}, may-alias: {1,2}]
  %s3 = sld [smem:[#allocation0]]
  $region41: #{tpu_custom_call.1} parent=0
    _
  %s5 = ssub.s32 1, %s3
  %s6 = scalar_select 0, %s5, %s3
  %s8 = sshll.u32 %s0, 4
  %s9 = int_to_ptr.vmem [resolvable:$true] %s8
  %11 = dma.vmem_to_smem %s9, 16, [#allocation3], [#allocation2]
  %13 = dma.done [#allocation2], 16
  %14 = sfence
  $region1: #{tpu_custom_call.1} parent=0
    #allocation4 [shape = 'u8[2048]{0}', space=vmem, size = 0x800, scoped, tag = 'input window, operand 1']
    #allocation5 [shape = 's32[2]{0}', space=sflag, size = 0x8, scoped, tag = 'scoped memory for tpu_custom_call.1']
    #allocation6 [shape = 's32[2]{0}', space=sflag, size = 0x8, scoped, tag = 'scoped memory for tpu_custom_call.1']
    #allocation7 [shape = 'u8[2048]{0}', space=vmem, size = 0x800, scoped, tag = 'output window, operand 0']
    %15 = vsyncpa [#allocation5], 0
    %s16 = scalar_lea.sflag [#allocation5], 1
    %17 = vsyncpa %s16, 0
    %18 = vsyncpa [#allocation6], 0
    %s19 = scalar_lea.sflag [#allocation6], 1
    %20 = vsyncpa %s19, 0
    loop: start=0, step=1, limit=4
    $region2: #{tpu_custom_call.1} parent=1 // loop_pre_header
      _
    $region3: #{tpu_custom_call.1} parent=1 // loop_header
      %s22 = sphi 0, %s26
      %p23 = scmp.ge.s32.totalorder %s22, 4
      %s29 = sphi 0, %s41
      %s30 = sphi 0, %s37
      %s31 = sphi 0, %s29
      %s32 = sphi 0, %s30
      %s33 = sphi 0, %s31
      %s34 = sphi 0, %s32
      %s46 = sphi 0, %s48
      %s49 = sphi 0, %s46
      %s50 = sphi 0, %s49
      %s66 = sphi 0, %s50
      %s74 = sphi 0, %s76
      %s77 = sphi 0, %s74
      %s78 = sphi 0, %s77
      %s94 = sphi 0, %s78
    $region4: #{tpu_custom_call.1} parent=1 // loop_header_branch
      %25 = sbr.rel (%p23) target = $region8
    $region5: #{tpu_custom_call.1} parent=1 // loop_body
      %s27 = ssub.s32 %s22, 1
      %s28 = ssub.s32 %s22, 2
      %s35 = sadd.s32 1, %s30
      %p36 = scmp.ge.s32.totalorder %s35, 1
      %s37 = scalar_select %p36, 0, %s35
      %s38 = sadd.s32 1, %s29
      %s39 = scalar_select %p36, %s38, %s29
      %p40 = scmp.ge.s32.totalorder %s39, 2
      %s41 = scalar_select %p40, 0, %s39
      %s42 = ssub.s32 %s29, %s41
      %s43 = ssub.s32 %s30, %s37
      %s44 = sor.u32 %s42, %s43
      %p45 = scmp.eq.s32.totalorder %s44, 0
      %s47 = sadd.s32 %s46, 1
      %s48 = scalar_select %p45, %s46, %s47
      %p51 = pneg %p45
      %p52 = scmp.eq.s32.totalorder %s22, 1
      %p53 = por %p51, %p52
      %p54 = scmp.ne.s32.totalorder %s46, %s49
      %p55 = scmp.eq.s32.totalorder %s22, 0
      %p56 = por %p54, %p55
      %p57 = scmp.ne.s32.totalorder %s46, %s49
      %p58 = scmp.eq.s32.totalorder %s27, 1
      %p59 = por %p57, %p58
      %p60 = scmp.ne.s32.totalorder %s49, %s50
      %p61 = scmp.eq.s32.totalorder %s27, 0
      %p62 = por %p60, %p61
      %p63 = scmp.ne.s32.totalorder %s49, %s50
      %p64 = scmp.eq.s32.totalorder %s28, 1
      %p65 = por %p63, %p64
      %p67 = scmp.ne.s32.totalorder %s50, %s66
      %p68 = scmp.eq.s32.totalorder %s28, 0
      %p69 = por %p67, %p68
      %s70 = ssub.s32 %s29, %s41
      %s71 = ssub.s32 %s30, %s37
      %s72 = sor.u32 %s70, %s71
      %p73 = scmp.eq.s32.totalorder %s72, 0
      %s75 = sadd.s32 %s74, 1
      %s76 = scalar_select %p73, %s74, %s75
      %p79 = pneg %p73
      %p80 = scmp.eq.s32.totalorder %s22, 1
      %p81 = por %p79, %p80
      %p82 = scmp.ne.s32.totalorder %s74, %s77
      %p83 = scmp.eq.s32.totalorder %s22, 0
      %p84 = por %p82, %p83
      %p85 = scmp.ne.s32.totalorder %s74, %s77
      %p86 = scmp.eq.s32.totalorder %s27, 1
      %p87 = por %p85, %p86
      %p88 = scmp.ne.s32.totalorder %s77, %s78
      %p89 = scmp.eq.s32.totalorder %s27, 0
      %p90 = por %p88, %p89
      %p91 = scmp.ne.s32.totalorder %s77, %s78
      %p92 = scmp.eq.s32.totalorder %s28, 1
      %p93 = por %p91, %p92
      %p95 = scmp.ne.s32.totalorder %s78, %s94
      %p96 = scmp.eq.s32.totalorder %s28, 0
      %p97 = por %p95, %p96
      %p98 = scmp.le.s32.totalorder 1, %s22
      %p99 = scmp.lt.s32.totalorder %s22, 3
      %p100 = pnand %p98, %p99
      %p101 = pneg %p100
      // Predicated region
      $region9: #{tpu_custom_call.1} parent=5 // pred_check
        _
      $region10: #{tpu_custom_call.1} parent=5 // pred_check_branch
        %103 = sbr.rel (%p100) target = $region12
      $region11: #{tpu_custom_call.1} parent=5 // pred_region
        %s104 = ssub.s32 %s22, 1
      $region12: #{tpu_custom_call.1} parent=5 // pred_fallthru
        _
      %p105 = scmp.lt.s32.totalorder %s22, 2
      // Predicated region
      $region13: #{tpu_custom_call.1} parent=5 // pred_check
        %p106 = pneg %p105
      $region14: #{tpu_custom_call.1} parent=5 // pred_check_branch
        %108 = sbr.rel (%p106) target = $region16
      $region15: #{tpu_custom_call.1} parent=5 // pred_region
        // Predicated region
        $region17: #{tpu_custom_call.1} parent=15 // pred_check
          %p109 = pneg %p56
        $region18: #{tpu_custom_call.1} parent=15 // pred_check_branch
          %111 = sbr.rel (%p109) target = $region20
        $region19: #{tpu_custom_call.1} parent=15 // pred_region
          %s112 = sand.u32 %s46, 1
          %s113 = scalar_lea.sflag [#allocation5], %s112
          %s114 = sand.u32 %s46, 1
          %s115 = smul.addr %s114, 2
          %s116 = scalar_lea.vmem [#allocation4], %s115
          %118 = vsyncadd %s113, 0
          %s119 = sadd.s32 %s30, %s29
          %s120 = smul.addr %s119, 2
          %s121 = scalar_lea.hbm %s1, %s120
          %s123 = sshll.u32 %s121, 4
          %s124 = int_to_ptr.hbm [resolvable:$true] %s123
          %s125 = sshll.u32 %s116, 4
          %s126 = int_to_ptr.vmem [resolvable:$true] %s125
          %128 = dma.hbm_to_vmem [thread:$0]  %s124, 32, %s126, %s113
        $region20: #{tpu_custom_call.1} parent=15 // pred_fallthru
          _
      $region16: #{tpu_custom_call.1} parent=5 // pred_fallthru
        _
      %p129 = scmp.le.s32.totalorder 1, %s22
      %p130 = scmp.lt.s32.totalorder %s22, 3
      %p131 = pnand %p129, %p130
      %p132 = pneg %p131
      // Predicated region
      $region21: #{tpu_custom_call.1} parent=5 // pred_check
        _
      $region22: #{tpu_custom_call.1} parent=5 // pred_check_branch
        %134 = sbr.rel (%p131) target = $region24
      $region23: #{tpu_custom_call.1} parent=5 // pred_region
        %s135 = ssub.s32 %s22, 1
        %s136 = sand.u32 %s49, 1
        %s137 = scalar_lea.sflag [#allocation5], %s136
        %s138 = sand.u32 %s49, 1
        %s139 = smul.addr %s138, 2
        %s140 = scalar_lea.vmem [#allocation4], %s139
        // Predicated region
        $region25: #{tpu_custom_call.1} parent=23 // pred_check
          %p141 = pneg %p62
        $region26: #{tpu_custom_call.1} parent=23 // pred_check_branch
          %143 = sbr.rel (%p141) target = $region28
        $region27: #{tpu_custom_call.1} parent=23 // pred_region
          %145 = dma.done %s137, 32
        $region28: #{tpu_custom_call.1} parent=23 // pred_fallthru
          _
        %s146 = sand.u32 %s49, 1
        %s147 = scalar_lea.sflag [#allocation5], %s146
        %s148 = sand.u32 %s49, 1
        %s149 = smul.addr %s148, 2
        %s150 = scalar_lea.vmem [#allocation4], %s149
        %p151 = pneg %p62
        %p152 = pneg %p59
        %p153 = pneg %p90
        %p154 = pneg %p87
        %s155 = sand.u32 %s77, 1
        %s156 = scalar_lea.sflag [#allocation6], %s155
        %s157 = sand.u32 %s77, 1
        %s158 = smul.addr %s157, 2
        %s159 = scalar_lea.vmem [#allocation7], %s158
        %s160 = sld [smem:[#allocation3 + %s31]]
        %v161 = vld [vmem:[%s140] sm:$0x3]
        %v162 = vstv %s160
        %v163 = vmul.f32 %v161, %v162
        %164 = vst [vmem:[%s159] sm:$0x3] %v163
        %s165 = sand.u32 %s77, 1
        %s166 = scalar_lea.sflag [#allocation6], %s165
        %s167 = sand.u32 %s77, 1
        %s168 = smul.addr %s167, 2
        %s169 = scalar_lea.vmem [#allocation7], %s168
        // Predicated region
        $region29: #{tpu_custom_call.1} parent=23 // pred_check
          %p170 = pneg %p87
        $region30: #{tpu_custom_call.1} parent=23 // pred_check_branch
          %172 = sbr.rel (%p170) target = $region32
        $region31: #{tpu_custom_call.1} parent=23 // pred_region
          %174 = vsyncadd %s166, 0
          %s175 = sadd.s32 %s32, %s31
          %s176 = smul.addr %s175, 2
          %s177 = scalar_lea.hbm %s2, %s176
          %s179 = sshll.u32 %s169, 4
          %s180 = int_to_ptr.vmem [resolvable:$true] %s179
          %s181 = sshll.u32 %s177, 4
          %s182 = int_to_ptr.hbm [resolvable:$true] %s181
          %184 = dma.vmem_to_hbm [thread:$0]  %s180, 32, %s182, %s166
        $region32: #{tpu_custom_call.1} parent=23 // pred_fallthru
          _
      $region24: #{tpu_custom_call.1} parent=5 // pred_fallthru
        _
      %p185 = scmp.le.s32.totalorder 2, %s22
      // Predicated region
      $region33: #{tpu_custom_call.1} parent=5 // pred_check
        %p186 = pneg %p185
      $region34: #{tpu_custom_call.1} parent=5 // pred_check_branch
        %188 = sbr.rel (%p186) target = $region36
      $region35: #{tpu_custom_call.1} parent=5 // pred_region
        %s189 = ssub.s32 %s22, 2
        // Predicated region
        $region37: #{tpu_custom_call.1} parent=35 // pred_check
          %p190 = pneg %p93
        $region38: #{tpu_custom_call.1} parent=35 // pred_check_branch
          %192 = sbr.rel (%p190) target = $region40
        $region39: #{tpu_custom_call.1} parent=35 // pred_region
          %s193 = sand.u32 %s78, 1
          %s194 = scalar_lea.sflag [#allocation6], %s193
          %s195 = sand.u32 %s78, 1
          %s196 = smul.addr %s195, 2
          %s197 = scalar_lea.vmem [#allocation7], %s196
          %199 = dma.done %s194, 32
        $region40: #{tpu_custom_call.1} parent=35 // pred_fallthru
          _
      $region36: #{tpu_custom_call.1} parent=5 // pred_fallthru
        _
    $region6: #{tpu_custom_call.1} parent=1 // loop_footer
      %s26 = sadd.s32 1, %s22
    $region7: #{tpu_custom_call.1} parent=1 // loop_footer_branch
      %21 = sbr.rel target = $region3
    $region8: #{tpu_custom_call.1} parent=1 // loop_exit
      _
    %200 = vsyncpa [#allocation5], 1
    %s201 = scalar_lea.sflag [#allocation5], 1
    %202 = vsyncpa %s201, 1
    %203 = vsyncpa [#allocation6], 1
    %s204 = scalar_lea.sflag [#allocation6], 1
    %205 = vsyncpa %s204, 1

</llo_original>
